<compile_context>
chip_gen: v6e
topology: v6e:2x2x1
jax: 0.10.0
libtpu: 0.0.40
codegen_flags: <defaults>
</compile_context>

<pallas_src>
import functools

import numpy as np
import jax
import jax.numpy as jnp
from jax import lax
from jax.experimental import pallas as pl
from jax.experimental.pallas import tpu as pltpu


# ---------------------------------------------------------------------------
# Exact (erf-based) GELU, matching torch.nn.GELU() default.  erf uses the
# Abramowitz-Stegun rational approximation (|err| < 1.5e-7, fp32 noise level),
# so only exp is needed on the EUP.
# ---------------------------------------------------------------------------
def _erf(x):
    a1, a2, a3, a4, a5 = 0.254829592, -0.284496736, 1.421413741, -1.453152027, 1.061405429
    p = 0.3275911
    sgn = jnp.sign(x)
    ax = jnp.abs(x)
    t = 1.0 / (1.0 + p * ax)
    poly = ((((a5 * t + a4) * t + a3) * t + a2) * t + a1) * t
    return sgn * (1.0 - poly * jnp.exp(-ax * ax))


def _gelu_exact(x):
    return 0.5 * x * (1.0 + _erf(x * np.float32(1.0 / np.sqrt(2.0))))


# ---------------------------------------------------------------------------
# Kernel A: product-key similarities as a single bf16 MXU matmul (f32 acc).
#   x_ref : (TN, D) bf16
#   w_ref : (D, 2*H*NK) bf16   (keys folded into the query projection)
#   sim   : (TN, 2*H*NK) f32   (token-major; lane-dense store)
# ---------------------------------------------------------------------------
def _sim_kernel(x_ref, w_ref, sim_ref):
    sim_ref[...] = jnp.dot(x_ref[...], w_ref[...],
                           preferred_element_type=jnp.float32)


# ---------------------------------------------------------------------------
# Kernel B: fused expert-row gather (manual DMAs from HBM) + expert mixing.
#   idx_ref : (N*H*K,) int32 in SMEM (scalar-prefetched, flat -> no padding)
#   x_ref   : (TN, D) f32
#   w_ref   : (TN, H*K) f32 routing weights (softmax already applied)
#   emb_hbm : (E, 2*D) bf16 fused [down | up] table left in HBM (pl.ANY)
#   out_ref : (TN, D) f32
#   buf     : (2, r2, 2*D) bf16 VMEM scratch (double-buffered half-tiles)
#   sems    : (2,) DMA semaphores (one per half)
# ---------------------------------------------------------------------------
def _mix_kernel(idx_ref, x_ref, w_ref, emb_hbm, out_ref, buf, sems,
                *, tn, hk, dim):
    tn2 = tn // 2
    r2 = tn2 * hk
    row0 = pl.program_id(0) * (tn * hk)

    def issue_half(half):
        base = row0 + half * r2

        @pl.loop(0, r2)
        def _(r):
            eid = idx_ref[base + r]
            pltpu.make_async_copy(emb_hbm.at[eid], buf.at[half, r],
                                  sems.at[half]).start()

    # Issue every row gather for both halves up front: transfers overlap the
    # remaining descriptor issue, and half 1's transfers overlap half 0's
    # compute.  (One 512-byte-class DMA per (token, expert) -> fused table
    # halves the descriptor count vs. separate down/up gathers.)
    issue_half(0)
    issue_half(1)

    # Routing weights for the whole tile, loaded once (softmax done in the
    # wrapper; applying it here is a single VPU multiply).
    w_all = w_ref[...]                                   # (TN, H*K)

    for half in range(2):
        # One bulk wait per half: DMA semaphores count bytes, and this
        # descriptor covers the whole (r2, 2*D) half buffer, i.e. exactly the
        # sum of the r2 identical row copies issued above.  It is never
        # start()ed -- it only encodes the expected byte count for wait().
        pltpu.make_async_copy(buf.at[half], buf.at[half], sems.at[half]).wait()

        lo = half * tn2
        xh = x_ref[pl.ds(lo, tn2), :]                    # (tn2, D) f32
        wh = w_all[lo:lo + tn2, :]                       # (tn2, hk) f32

        # Gather buffer in its native layout (D last on lanes); the reshape
        # only splits the leading sublane-major dim, so it is a free view.
        fused = buf[half].astype(jnp.float32)            # (r2, 2*D)
        fused3 = fused.reshape(tn2, hk, 2 * dim)
        wd = fused3[:, :, :dim]                          # (tn2, hk, D)
        wu = fused3[:, :, dim:]                          # (tn2, hk, D)

        # Down projection: hid[t, j] = <x_t, w_down_{t,j}> (lane-sum on VPU/XLU).
        # TODO(synk): could route this per-token contraction through the MXU;
        # kept on the VPU since the kernel is DMA-descriptor bound.
        hid = jnp.sum(xh[:, None, :] * wd, axis=-1)      # (tn2, hk)
        g = _gelu_exact(hid) * wh                        # (tn2, hk)

        # Up projection: out[t, :] = sum_j g[t, j] * w_up_{t,j} (sublane reduce).
        out_ref[pl.ds(lo, tn2), :] = jnp.sum(g[:, :, None] * wu, axis=1)


# ---------------------------------------------------------------------------
# One-time (per weight update) parameter preparation, OUTSIDE the hot path:
#   - fold the product keys into the query projection (bf16 for the MXU),
#   - fuse the down/up expert tables into one (E, 2*D) bf16 gather table.
# ---------------------------------------------------------------------------
def peer_prepare_params(wq, keys_param, down_embed, up_embed, *,
                        heads, num_keys, dim_key):
    dim = wq.shape[0]
    wq4 = wq.reshape(dim, 2, heads, dim_key)
    w_comb = jnp.einsum('dphe,hkpe->dphk', wq4, keys_param)
    w_comb = w_comb.reshape(dim, 2 * heads * num_keys).astype(jnp.bfloat16)
    fused_embed = jnp.concatenate(
        [down_embed.astype(jnp.bfloat16), up_embed.astype(jnp.bfloat16)], axis=-1)
    return w_comb, fused_embed


# ---------------------------------------------------------------------------
# PEER forward (hot path).
# ---------------------------------------------------------------------------
def peer_forward(x, w_comb, fused_embed, *,
                 heads, num_keys, pk_topk, k_per_head,
                 tn_sim=64, tn_mix=64):
    b, n, dim = x.shape
    N = b * n
    assert N % tn_sim == 0 and N % tn_mix == 0
    assert tn_mix % 16 == 0, "mix tile must be a multiple of 16 tokens"
    x_flat = x.reshape(N, dim)
    n_cols = 2 * heads * num_keys

    # ---- Kernel A: similarities (bf16 MXU, f32 accumulate) ----------------
    # Grid extents are even (>= 2) so v7x's two TensorCores stay balanced.
    sim_flat = pl.pallas_call(
        _sim_kernel,
        out_shape=jax.ShapeDtypeStruct((N, n_cols), jnp.float32),
        grid=(N // tn_sim,),
        in_specs=[
            pl.BlockSpec((tn_sim, dim), lambda i: (i, 0)),
            pl.BlockSpec((dim, n_cols), lambda i: (0, 0)),
        ],
        out_specs=pl.BlockSpec((tn_sim, n_cols), lambda i: (i, 0)),
        compiler_params=pltpu.CompilerParams(
            dimension_semantics=("parallel",),
            vmem_limit_bytes=32 * 1024 * 1024),
        # TODO(synk): at production dim/num_keys, tile the 2*H*NK column axis
        # with a second grid dimension (and use tn_sim >= 256 on v6e) so the
        # resident weight block fits v7x's 64 MiB / v5e's 16 MiB budgets.
    )(x_flat.astype(jnp.bfloat16), w_comb)

    # Free (layout-preserving) reshape: (N, 2*H*NK) -> (N, 2, H, NK).
    sim = sim_flat.reshape(N, 2, heads, num_keys)

    # TODO(synk): the two top-k selections and the product-key index
    # combination are data-dependent sorts; kept in plain JAX.
    sx, ix = lax.top_k(sim[:, 0], pk_topk)                      # (N, H, pk)
    sy, iy = lax.top_k(sim[:, 1], pk_topk)
    all_s = (sx[..., :, None] + sy[..., None, :]).reshape(N, heads, pk_topk * pk_topk)
    all_i = (ix[..., :, None] * num_keys + iy[..., None, :]).reshape(N, heads, pk_topk * pk_topk)
    scores, pk_idx = lax.top_k(all_s, k_per_head)               # (N, H, K)
    indices = jnp.take_along_axis(all_i, pk_idx, axis=-1)       # (N, H, K)

    hk = heads * k_per_head
    # Exact per-head routing softmax, done once in the wrapper: the scores
    # tensor round-trips HBM either way, so this adds no traffic and removes
    # the approximate in-kernel reciprocal.
    mix_w = jax.nn.softmax(scores, axis=-1).reshape(N, hk).astype(jnp.float32)
    idx_flat = indices.reshape(N * hk).astype(jnp.int32)        # flat -> no SMEM pad

    # ---- Kernel B: fused gather + mixing ----------------------------------
    r2 = (tn_mix // 2) * hk
    mix_kernel = functools.partial(_mix_kernel, tn=tn_mix, hk=hk, dim=dim)
    out_flat = pl.pallas_call(
        mix_kernel,
        out_shape=jax.ShapeDtypeStruct((N, dim), jnp.float32),
        grid_spec=pltpu.PrefetchScalarGridSpec(
            num_scalar_prefetch=1,
            grid=(N // tn_mix,),
            in_specs=[
                pl.BlockSpec((tn_mix, dim), lambda i, idx: (i, 0)),
                pl.BlockSpec((tn_mix, hk), lambda i, idx: (i, 0)),
                pl.BlockSpec(memory_space=pl.ANY),   # fused [down|up] table in HBM
            ],
            out_specs=pl.BlockSpec((tn_mix, dim), lambda i, idx: (i, 0)),
            scratch_shapes=[
                pltpu.VMEM((2, r2, 2 * dim), fused_embed.dtype),
                pltpu.SemaphoreType.DMA((2,)),
            ]),
        compiler_params=pltpu.CompilerParams(
            dimension_semantics=("parallel",),
            vmem_limit_bytes=32 * 1024 * 1024),
        # TODO(synk): re-derive tn_mix per TPU generation (64 MiB VMEM on v7x)
        # and dedupe expert ids within a tile before gathering.
    )(idx_flat, x_flat, mix_w, fused_embed)

    return out_flat.reshape(b, n, dim)


# ---------------------------------------------------------------------------
# Pure-JAX reference (mirrors the PyTorch forward 1:1) for the self-test.
# ---------------------------------------------------------------------------
def peer_reference(x, wq, keys_param, down_embed, up_embed, *,
                   heads, num_keys, dim_key, pk_topk, k_per_head):
    b, n, dim = x.shape
    de = down_embed.astype(jnp.float32)
    ue = up_embed.astype(jnp.float32)
    q = jnp.einsum('bnd,de->bne', x, wq)
    q = q.reshape(b, n, 2, heads, dim_key).transpose(2, 0, 1, 3, 4)     # p b n h d
    sim = jnp.einsum('pbnhd,hkpd->pbnhk', q, keys_param)
    sx, ix = lax.top_k(sim[0], pk_topk)
    sy, iy = lax.top_k(sim[1], pk_topk)
    all_s = (sx[..., :, None] + sy[..., None, :]).reshape(b, n, heads, pk_topk * pk_topk)
    all_i = (ix[..., :, None] * num_keys + iy[..., None, :]).reshape(b, n, heads, pk_topk * pk_topk)
    scores, pk_idx = lax.top_k(all_s, k_per_head)
    indices = jnp.take_along_axis(all_i, pk_idx, axis=-1)               # (b,n,h,k)
    wd = de[indices]
    wu = ue[indices]
    hid = jnp.einsum('bnd,bnhkd->bnhk', x, wd)
    g = jax.nn.gelu(hid, approximate=False)
    g = g * jax.nn.softmax(scores, axis=-1)
    return jnp.einsum('bnhk,bnhkd->bnd', g, wu)


if __name__ == "__main__":
    B, S, DIM = 2, 64, 128                 # N = 128 tokens, lane-dense outputs
    HEADS = 4
    NUM_KEYS = 16                          # num_experts = 256 (perfect square)
    NUM_EXPERTS = NUM_KEYS * NUM_KEYS
    K_PER_HEAD = 8                         # num_experts_per_head
    PK_TOPK = K_PER_HEAD                   # product_key_topk default
    DIM_KEY = DIM // 2
    TN_SIM = 64                            # token tile for the similarity kernel
    TN_MIX = 64                            # token tile for the gather+mix kernel

    key = jax.random.PRNGKey(0)
    kx, kw, kk, kd, ku = jax.random.split(key, 5)

    # x / Wq / keys are drawn on a coarse power-of-two grid so the product-key
    # similarities are exactly representable (x and the folded bf16 W_comb are
    # exact, MXU accumulates in f32); the top-k routing decisions are then
    # bit-identical between the Pallas path and the reference.
    x = jax.random.randint(kx, (B, S, DIM), -1, 2).astype(jnp.float32)
    wq = jax.random.randint(kw, (DIM, 2 * HEADS * DIM_KEY), -2, 3).astype(jnp.float32) / 64.0
    keys_param = jax.random.randint(kk, (HEADS, NUM_KEYS, 2, DIM_KEY), -2, 3).astype(jnp.float32) / 64.0

    # Expert embedding tables stored in bf16 (halves the HBM gather traffic of
    # kernel B); all kernel arithmetic is f32.
    down_embed = jax.random.normal(kd, (NUM_EXPERTS, DIM), jnp.float32).astype(jnp.bfloat16)
    up_embed = jax.random.normal(ku, (NUM_EXPERTS, DIM), jnp.float32).astype(jnp.bfloat16)

    # One-time parameter prep (outside the hot forward path).
    w_comb, fused_embed = peer_prepare_params(
        wq, keys_param, down_embed, up_embed,
        heads=HEADS, num_keys=NUM_KEYS, dim_key=DIM_KEY)

    out = peer_forward(x, w_comb, fused_embed,
                       heads=HEADS, num_keys=NUM_KEYS,
                       pk_topk=PK_TOPK, k_per_head=K_PER_HEAD,
                       tn_sim=TN_SIM, tn_mix=TN_MIX)
    out = jax.block_until_ready(out)

    ref = peer_reference(x, wq, keys_param, down_embed, up_embed,
                         heads=HEADS, num_keys=NUM_KEYS, dim_key=DIM_KEY,
                         pk_topk=PK_TOPK, k_per_head=K_PER_HEAD)

    # Routing / gather / mixing bugs show up as O(1) errors (output std ~ 4);
    # the slack below only absorbs the rational erf approximation in GELU and
    # fp32 reassociation differences.
    np.testing.assert_allclose(np.asarray(out), np.asarray(ref), rtol=1e-2, atol=1e-2)

    print("KERNEL_OK")
</pallas_src>

<mosaic_0001>
module attributes {stable_mosaic.version = 11 : i64} {
  func.func @_sim_kernel(%arg0: i32, %arg1: memref<64x128xbf16, #tpu.memory_space<vmem>>, %arg2: memref<128x128xbf16, #tpu.memory_space<vmem>>, %arg3: memref<64x128xf32, #tpu.memory_space<vmem>>) attributes {dimension_semantics = [#tpu.dimension_semantics<parallel>], iteration_bounds = array<i64: 2>, scalar_prefetch = 0 : i64, scratch_operands = 0 : i64, tpu.core_type = #tpu.core_type<tc>, window_params = [{transform_indices = @transform_0, window_bounds = array<i64: 64, 128>}, {pipeline_mode = #tpu.pipeline_mode<synchronous>, transform_indices = @transform_1, window_bounds = array<i64: 128, 128>}, {transform_indices = @transform_2, window_bounds = array<i64: 64, 128>}]} {
    %c0 = arith.constant 0 : index
    %c0_0 = arith.constant 0 : index
    %0 = vector.load %arg1[%c0, %c0_0] : memref<64x128xbf16, #tpu.memory_space<vmem>>, vector<64x128xbf16>
    %c0_1 = arith.constant 0 : index
    %c0_2 = arith.constant 0 : index
    %1 = vector.load %arg2[%c0_1, %c0_2] : memref<128x128xbf16, #tpu.memory_space<vmem>>, vector<128x128xbf16>
    %cst = arith.constant dense<0.000000e+00> : vector<64x128xf32>
    %2 = tpu.matmul %0, %1, %cst {dimension_numbers = #tpu.dot_dimension_numbers<[1], [0], [0], [1], [0, 0, 1, 1], [], []>} : vector<64x128xbf16>, vector<128x128xbf16>, vector<64x128xf32> -> vector<64x128xf32>
    %c0_3 = arith.constant 0 : index
    %c0_4 = arith.constant 0 : index
    %3 = vector.load %arg3[%c0_3, %c0_4] : memref<64x128xf32, #tpu.memory_space<vmem>>, vector<64x128xf32>
    tpu.vector_store %arg3[%c0_3, %c0_4], %2 {strides = array<i32>} : memref<64x128xf32, #tpu.memory_space<vmem>>, vector<64x128xf32>,
    return
  }
  func.func @transform_0(%arg0: i32) -> (i32, i32) {
    %c0_i32 = arith.constant 0 : i32
    %c0_i32_0 = arith.constant 0 : i32
    return %arg0, %c0_i32 : i32, i32
  }
  func.func @transform_1(%arg0: i32) -> (i32, i32) {
    %c0_i32 = arith.constant 0 : i32
    %c0_i32_0 = arith.constant 0 : i32
    %c0_i32_1 = arith.constant 0 : i32
    return %c0_i32, %c0_i32_0 : i32, i32
  }
  func.func @transform_2(%arg0: i32) -> (i32, i32) {
    %c0_i32 = arith.constant 0 : i32
    %c0_i32_0 = arith.constant 0 : i32
    return %arg0, %c0_i32 : i32, i32
  }
}

</mosaic_0001>

<llo_original>
// kernel: tpu_custom_call.1
$region0: #{tpu_custom_call.1}
  #allocation0 [shape = 'u32[]', space=smem, size = 0x4, offset = 0x4, fixed_abs, tag = 'smem constant byte address 0x4 - core index']
  #allocation1 [shape = 'u32[144,128]{1,0:T(1,128)}', space=vmem, size = 0x12000, scoped, tag = 'internal scratch']
  %s0 = inlined_call_operand.hbm [shape: bf16[128,128], index: 0, kind: input, shape index: {}]
  %s1 = inlined_call_operand.hbm [shape: bf16[128,128], index: 1, kind: input, shape index: {}]
  %s2 = inlined_call_operand.hbm [shape: f32[128,128], index: 2, kind: output, shape index: {}]
  %s3 = sld [smem:[#allocation0]]
  $region49: #{tpu_custom_call.1} parent=0
    _
  %s5 = ssub.s32 1, %s3
  %s6 = scalar_select 0, %s5, %s3
  $region1: #{tpu_custom_call.1} parent=0
    #allocation2 [shape = 'u8[32768]{0}', space=vmem, size = 0x8000, scoped, tag = 'input window, operand 0']
    #allocation3 [shape = 's32[2]{0}', space=sflag, size = 0x8, scoped, tag = 'scoped memory for tpu_custom_call.1']
    #allocation4 [shape = 's32[2]{0}', space=sflag, size = 0x8, scoped, tag = 'scoped memory for tpu_custom_call.1']
    #allocation5 [shape = 'u8[32768]{0}', space=vmem, size = 0x8000, scoped, tag = 'input window, operand 1, single buffered']
    #allocation6 [shape = 's32[1]{0}', space=sflag, size = 0x4, scoped, tag = 'scoped memory for tpu_custom_call.1']
    #allocation7 [shape = 'u8[65536]{0}', space=vmem, size = 0x10000, scoped, tag = 'output window, operand 0']
    %7 = vsyncpa [#allocation3], 0
    %s8 = scalar_lea.sflag [#allocation3], 1
    %9 = vsyncpa %s8, 0
    %10 = vsyncpa [#allocation6], 0
    %11 = vsyncpa [#allocation4], 0
    %s12 = scalar_lea.sflag [#allocation4], 1
    %13 = vsyncpa %s12, 0
    loop: start=0, step=1, limit=4
    $region2: #{tpu_custom_call.1} parent=1 // loop_pre_header
      _
    $region3: #{tpu_custom_call.1} parent=1 // loop_header
      %s15 = sphi 0, %s19
      %p16 = scmp.ge.s32.totalorder %s15, 4
      %s25 = sphi 0, %s27
      %s28 = sphi 0, %s25
      %s29 = sphi 0, %s28
      %s45 = sphi 0, %s29
      %s49 = sphi 0, %s49
      %s51 = sphi 0, %s49
      %s52 = sphi 0, %s51
      %s66 = sphi 0, %s52
      %s72 = sphi 0, %s74
      %s75 = sphi 0, %s72
      %s76 = sphi 0, %s75
      %s92 = sphi 0, %s76
    $region4: #{tpu_custom_call.1} parent=1 // loop_header_branch
      %18 = sbr.rel (%p16) target = $region8
    $region5: #{tpu_custom_call.1} parent=1 // loop_body
      %s20 = ssub.s32 %s15, 1
      %s21 = ssub.s32 %s15, 2
      %s22 = sadd.s32 %s15, 1
      %s23 = ssub.s32 %s15, %s22
      %p24 = scmp.eq.s32.totalorder %s23, 0
      %s26 = sadd.s32 %s25, 1
      %s27 = scalar_select %p24, %s25, %s26
      %p30 = pneg %p24
      %p31 = scmp.eq.s32.totalorder %s15, 1
      %p32 = por %p30, %p31
      %p33 = scmp.ne.s32.totalorder %s25, %s28
      %p34 = scmp.eq.s32.totalorder %s15, 0
      %p35 = por %p33, %p34
      %p36 = scmp.ne.s32.totalorder %s25, %s28
      %p37 = scmp.eq.s32.totalorder %s20, 1
      %p38 = por %p36, %p37
      %p39 = scmp.ne.s32.totalorder %s28, %s29
      %p40 = scmp.eq.s32.totalorder %s20, 0
      %p41 = por %p39, %p40
      %p42 = scmp.ne.s32.totalorder %s28, %s29
      %p43 = scmp.eq.s32.totalorder %s21, 1
      %p44 = por %p42, %p43
      %p46 = scmp.ne.s32.totalorder %s29, %s45
      %p47 = scmp.eq.s32.totalorder %s21, 0
      %p48 = por %p46, %p47
      %s50 = sadd.s32 %s49, 1
      %p53 = scmp.eq.s32.totalorder %s15, 1
      %p54 = scmp.ne.s32.totalorder %s49, %s51
      %p55 = scmp.eq.s32.totalorder %s15, 0
      %p56 = por %p54, %p55
      %p57 = scmp.ne.s32.totalorder %s49, %s51
      %p58 = scmp.eq.s32.totalorder %s20, 1
      %p59 = por %p57, %p58
      %p60 = scmp.ne.s32.totalorder %s51, %s52
      %p61 = scmp.eq.s32.totalorder %s20, 0
      %p62 = por %p60, %p61
      %p63 = scmp.ne.s32.totalorder %s51, %s52
      %p64 = scmp.eq.s32.totalorder %s21, 1
      %p65 = por %p63, %p64
      %p67 = scmp.ne.s32.totalorder %s52, %s66
      %p68 = scmp.eq.s32.totalorder %s21, 0
      %p69 = por %p67, %p68
      %s70 = ssub.s32 %s15, %s22
      %p71 = scmp.eq.s32.totalorder %s70, 0
      %s73 = sadd.s32 %s72, 1
      %s74 = scalar_select %p71, %s72, %s73
      %p77 = pneg %p71
      %p78 = scmp.eq.s32.totalorder %s15, 1
      %p79 = por %p77, %p78
      %p80 = scmp.ne.s32.totalorder %s72, %s75
      %p81 = scmp.eq.s32.totalorder %s15, 0
      %p82 = por %p80, %p81
      %p83 = scmp.ne.s32.totalorder %s72, %s75
      %p84 = scmp.eq.s32.totalorder %s20, 1
      %p85 = por %p83, %p84
      %p86 = scmp.ne.s32.totalorder %s75, %s76
      %p87 = scmp.eq.s32.totalorder %s20, 0
      %p88 = por %p86, %p87
      %p89 = scmp.ne.s32.totalorder %s75, %s76
      %p90 = scmp.eq.s32.totalorder %s21, 1
      %p91 = por %p89, %p90
      %p93 = scmp.ne.s32.totalorder %s76, %s92
      %p94 = scmp.eq.s32.totalorder %s21, 0
      %p95 = por %p93, %p94
      %p96 = scmp.le.s32.totalorder 1, %s15
      %p97 = scmp.lt.s32.totalorder %s15, 3
      %p98 = pnand %p96, %p97
      %p99 = pneg %p98
      // Predicated region
      $region9: #{tpu_custom_call.1} parent=5 // pred_check
        _
      $region10: #{tpu_custom_call.1} parent=5 // pred_check_branch
        %101 = sbr.rel (%p98) target = $region12
      $region11: #{tpu_custom_call.1} parent=5 // pred_region
        %s102 = ssub.s32 %s15, 1
        // Predicated region
        $region13: #{tpu_custom_call.1} parent=11 // pred_check
          %p103 = pneg %p62
        $region14: #{tpu_custom_call.1} parent=11 // pred_check_branch
          %105 = sbr.rel (%p103) target = $region16
        $region15: #{tpu_custom_call.1} parent=11 // pred_region
          %s107 = ssub.s32 1024, 1024
          %108 = vsyncadd [#allocation6], %s107
          %s109 = sshll.u32 [#allocation5], 4
          %s110 = int_to_ptr.vmem [resolvable:$true] %s109
          %115 = dma.hbm_to_vmem [thread:$0]  %s1, 1024, %s110, [#allocation6], 64, 64, 4
        $region16: #{tpu_custom_call.1} parent=11 // pred_fallthru
          _
      $region12: #{tpu_custom_call.1} parent=5 // pred_fallthru
        _
      %p116 = scmp.lt.s32.totalorder %s15, 2
      // Predicated region
      $region17: #{tpu_custom_call.1} parent=5 // pred_check
        %p117 = pneg %p116
      $region18: #{tpu_custom_call.1} parent=5 // pred_check_branch
        %119 = sbr.rel (%p117) target = $region20
      $region19: #{tpu_custom_call.1} parent=5 // pred_region
        // Predicated region
        $region21: #{tpu_custom_call.1} parent=19 // pred_check
          %p120 = pneg %p35
        $region22: #{tpu_custom_call.1} parent=19 // pred_check_branch
          %122 = sbr.rel (%p120) target = $region24
        $region23: #{tpu_custom_call.1} parent=19 // pred_region
          %s123 = sand.u32 %s25, 1
          %s124 = scalar_lea.sflag [#allocation3], %s123
          %s125 = sand.u32 %s25, 1
          %s126 = smul.addr %s125, 32
          %s127 = scalar_lea.vmem [#allocation2], %s126
          %s128 = smul.u32 8, %s15
          %s130 = ssub.s32 512, 512
          %131 = vsyncadd %s124, %s130
          %s132 = smul.addr %s128, 64
          %s133 = scalar_lea.hbm %s0, %s132
          %s134 = sshll.u32 %s127, 4
          %s135 = int_to_ptr.vmem [resolvable:$true] %s134
          %140 = dma.hbm_to_vmem [thread:$0]  %s133, 512, %s135, %s124, 64, 64, 4
        $region24: #{tpu_custom_call.1} parent=19 // pred_fallthru
          _
      $region20: #{tpu_custom_call.1} parent=5 // pred_fallthru
        _
      %p141 = scmp.le.s32.totalorder 1, %s15
      %p142 = scmp.lt.s32.totalorder %s15, 3
      %p143 = pnand %p141, %p142
      %p144 = pneg %p143
      // Predicated region
      $region25: #{tpu_custom_call.1} parent=5 // pred_check
        _
      $region26: #{tpu_custom_call.1} parent=5 // pred_check_branch
        %146 = sbr.rel (%p143) target = $region28
      $region27: #{tpu_custom_call.1} parent=5 // pred_region
        %s147 = ssub.s32 %s15, 1
        %s148 = sand.u32 %s28, 1
        %s149 = scalar_lea.sflag [#allocation3], %s148
        %s150 = sand.u32 %s28, 1
        %s151 = smul.addr %s150, 32
        %s152 = scalar_lea.vmem [#allocation2], %s151
        // Predicated region
        $region29: #{tpu_custom_call.1} parent=27 // pred_check
          %p153 = pneg %p41
        $region30: #{tpu_custom_call.1} parent=27 // pred_check_branch
          %155 = sbr.rel (%p153) target = $region32
        $region31: #{tpu_custom_call.1} parent=27 // pred_region
          %156 = dma.done %s149, 512
        $region32: #{tpu_custom_call.1} parent=27 // pred_fallthru
          _
        // Predicated region
        $region33: #{tpu_custom_call.1} parent=27 // pred_check
          %p157 = pneg %p62
        $region34: #{tpu_custom_call.1} parent=27 // pred_check_branch
          %159 = sbr.rel (%p157) target = $region36
        $region35: #{tpu_custom_call.1} parent=27 // pred_region
          %160 = dma.done [#allocation6], 1024
        $region36: #{tpu_custom_call.1} parent=27 // pred_fallthru
          _
        %s161 = sand.u32 %s28, 1
        %s162 = scalar_lea.sflag [#allocation3], %s161
        %s163 = sand.u32 %s28, 1
        %s164 = smul.addr %s163, 32
        %s165 = scalar_lea.vmem [#allocation2], %s164
        %p166 = pneg %p41
        %p167 = pneg %p38
        %p168 = pneg %p62
        %p169 = pneg %p59
        %p170 = pneg %p88
        %p171 = pneg %p85
        %s172 = sand.u32 %s75, 1
        %s173 = scalar_lea.sflag [#allocation4], %s172
        %s174 = sand.u32 %s75, 1
        %s175 = smul.addr %s174, 64
        %s176 = scalar_lea.vmem [#allocation7], %s175
        %s177 = smul.u32 8, %s20
        %s178 = smul.u32 8, %s20
        %v180 = vld [vmem:[%s152] sm:$0xf]
        %v181 = vld [vmem:[%s152 + $0x4] sm:$0xf]
        %v182 = vld [vmem:[%s152 + $0x8] sm:$0xf]
        %v183 = vld [vmem:[%s152 + $0xc] sm:$0xf]
        %v184 = vld [vmem:[%s152 + $0x10] sm:$0xf]
        %v185 = vld [vmem:[%s152 + $0x14] sm:$0xf]
        %v186 = vld [vmem:[%s152 + $0x18] sm:$0xf]
        %v187 = vld [vmem:[%s152 + $0x1c] sm:$0xf]
        %v188 = vld [vmem:[#allocation5] sm:$0xf]
        %v189 = vld [vmem:[#allocation5 + $0x4] sm:$0xf]
        %v190 = vld [vmem:[#allocation5 + $0x8] sm:$0xf]
        %v191 = vld [vmem:[#allocation5 + $0xc] sm:$0xf]
        %v192 = vld [vmem:[#allocation5 + $0x10] sm:$0xf]
        %v193 = vld [vmem:[#allocation5 + $0x14] sm:$0xf]
        %v194 = vld [vmem:[#allocation5 + $0x18] sm:$0xf]
        %v195 = vld [vmem:[#allocation5 + $0x1c] sm:$0xf]
        %v196 = vld [vmem:[#allocation5 + $0x20] sm:$0xf]
        %v197 = vld [vmem:[#allocation5 + $0x24] sm:$0xf]
        %v198 = vld [vmem:[#allocation5 + $0x28] sm:$0xf]
        %v199 = vld [vmem:[#allocation5 + $0x2c] sm:$0xf]
        %v200 = vld [vmem:[#allocation5 + $0x30] sm:$0xf]
        %v201 = vld [vmem:[#allocation5 + $0x34] sm:$0xf]
        %v202 = vld [vmem:[#allocation5 + $0x38] sm:$0xf]
        %v203 = vld [vmem:[#allocation5 + $0x3c] sm:$0xf]
        %v212 = vunpack.c.l.b16 %v180
        %v213 = vunpack.c.l.b16 %v181
        %v214 = vunpack.c.l.b16 %v182
        %v215 = vunpack.c.l.b16 %v183
        %v216 = vunpack.c.l.b16 %v184
        %v217 = vunpack.c.l.b16 %v185
        %v218 = vunpack.c.l.b16 %v186
        %v219 = vunpack.c.l.b16 %v187
        %v220 = vpack.c.b16 %v213, %v212
        %v221 = vpack.c.b16 %v215, %v214
        %v222 = vpack.c.b16 %v217, %v216
        %v223 = vpack.c.b16 %v219, %v218
        %v244 = vunpack.c.l.b16 %v188
        %v245 = vunpack.c.l.b16 %v189
        %v246 = vunpack.c.l.b16 %v190
        %v247 = vunpack.c.l.b16 %v191
        %v248 = vunpack.c.l.b16 %v192
        %v249 = vunpack.c.l.b16 %v193
        %v250 = vunpack.c.l.b16 %v194
        %v251 = vunpack.c.l.b16 %v195
        %v252 = vunpack.c.l.b16 %v196
        %v253 = vunpack.c.l.b16 %v197
        %v254 = vunpack.c.l.b16 %v198
        %v255 = vunpack.c.l.b16 %v199
        %v256 = vunpack.c.l.b16 %v200
        %v257 = vunpack.c.l.b16 %v201
        %v258 = vunpack.c.l.b16 %v202
        %v259 = vunpack.c.l.b16 %v203
        %v260 = vpack.c.b16 %v245, %v244
        %v261 = vpack.c.b16 %v247, %v246
        %v262 = vpack.c.b16 %v249, %v248
        %v263 = vpack.c.b16 %v251, %v250
        %v264 = vpack.c.b16 %v253, %v252
        %v265 = vpack.c.b16 %v255, %v254
        %v266 = vpack.c.b16 %v257, %v256
        %v267 = vpack.c.b16 %v259, %v258
        %276 = vmatprep.subr.bf16.mxu0 0
        %277 = vmatpush1.bf16.msra.mxu0 %v267
        %278 = vmatprep.subr.bf16.mxu0 0
        %279 = vmatpush1.bf16.msra.mxu0 %v266
        %280 = vmatprep.subr.bf16.mxu0 0
        %281 = vmatpush1.bf16.msra.mxu0 %v265
        %282 = vmatprep.subr.bf16.mxu0 0
        %283 = vmatpush1.bf16.msra.mxu0 %v264
        %284 = vmatprep.subr.bf16.mxu0 0
        %285 = vmatpush1.bf16.msra.mxu0 %v263
        %286 = vmatprep.subr.bf16.mxu0 0
        %287 = vmatpush1.bf16.msra.mxu0 %v262
        %288 = vmatprep.subr.bf16.mxu0 0
        %289 = vmatpush1.bf16.msra.mxu0 %v261
        %290 = vmatprep.subr.bf16.mxu0 0
        %291 = vmatpush1.bf16.msra.mxu0 %v260
        %292 = vmatprep.subr.bf16.mxu0 0
        %293 = vmatpush2.bf16.msra.mxu0 0
        %294 = vmatprep.subr.bf16.mxu0 0
        %295 = vmatpush2.bf16.msra.mxu0 0
        %296 = vmatprep.subr.bf16.mxu0 0
        %297 = vmatpush2.bf16.msra.mxu0 0
        %298 = vmatprep.subr.bf16.mxu0 0
        %299 = vmatpush2.bf16.msra.mxu0 0
        %300 = vmatprep.subr.bf16.mxu0 0
        %301 = vmatpush2.bf16.msra.mxu0 0
        %302 = vmatprep.subr.bf16.mxu0 0
        %303 = vmatpush2.bf16.msra.mxu0 0
        %304 = vmatprep.subr.bf16.mxu0 0
        %305 = vmatpush2.bf16.msra.mxu0 0
        %306 = vmatprep.subr.bf16.mxu0 0
        %307 = vmatpush2.bf16.msra.mxu0 0
        %308 = vmatprep.mubr.bf16.mxu0 0
        %309 = vmatmul.mubr.bf16.gmra.mxu0 %v220
        %v310 = vpop.f32.mrf.mxu0
        %v311 = vadd.f32 0.0, %v310
        %v312 = vpop.f32.mrf.mxu0
        %v313 = vpop.f32.mrf.mxu0
        %v314 = vadd.f32 0.0, %v313
        %v315 = vpop.f32.mrf.mxu0
        %316 = vmatprep.mubr.bf16.mxu0 0
        %317 = vmatmul.mubr.bf16.gmra.mxu0 %v221
        %v318 = vpop.f32.mrf.mxu0
        %v319 = vadd.f32 0.0, %v318
        %v320 = vpop.f32.mrf.mxu0
        %v321 = vpop.f32.mrf.mxu0
        %v322 = vadd.f32 0.0, %v321
        %v323 = vpop.f32.mrf.mxu0
        %324 = vmatprep.mubr.bf16.mxu0 0
        %325 = vmatmul.mubr.bf16.gmra.mxu0 %v222
        %v326 = vpop.f32.mrf.mxu0
        %v327 = vadd.f32 0.0, %v326
        %v328 = vpop.f32.mrf.mxu0
        %v329 = vpop.f32.mrf.mxu0
        %v330 = vadd.f32 0.0, %v329
        %v331 = vpop.f32.mrf.mxu0
        %332 = vmatprep.mubr.bf16.mxu0 0
        %333 = vmatmul.mubr.bf16.gmra.mxu0 %v223
        %v334 = vpop.f32.mrf.mxu0
        %v335 = vadd.f32 0.0, %v334
        %v336 = vpop.f32.mrf.mxu0
        %v337 = vpop.f32.mrf.mxu0
        %v338 = vadd.f32 0.0, %v337
        %v339 = vpop.f32.mrf.mxu0
        %340 = vdwg.mxu0
        %341 = vst [vmem:[%s176] sm:$0xff] %v311
        %342 = vst [vmem:[%s176 + $0x8] sm:$0xff] %v314
        %343 = vst [vmem:[%s176 + $0x10] sm:$0xff] %v319
        %344 = vst [vmem:[%s176 + $0x18] sm:$0xff] %v322
        %345 = vst [vmem:[%s176 + $0x20] sm:$0xff] %v327
        %346 = vst [vmem:[%s176 + $0x28] sm:$0xff] %v330
        %347 = vst [vmem:[%s176 + $0x30] sm:$0xff] %v335
        %348 = vst [vmem:[%s176 + $0x38] sm:$0xff] %v338
        %s349 = sand.u32 %s75, 1
        %s350 = scalar_lea.sflag [#allocation4], %s349
        %s351 = sand.u32 %s75, 1
        %s352 = smul.addr %s351, 64
        %s353 = scalar_lea.vmem [#allocation7], %s352
        // Predicated region
        $region37: #{tpu_custom_call.1} parent=27 // pred_check
          %p354 = pneg %p85
        $region38: #{tpu_custom_call.1} parent=27 // pred_check_branch
          %356 = sbr.rel (%p354) target = $region40
        $region39: #{tpu_custom_call.1} parent=27 // pred_region
          %s357 = smul.u32 8, %s20
          %s359 = ssub.s32 1024, 1024
          %360 = vsyncadd %s350, %s359
          %s361 = smul.addr %s357, 128
          %s362 = scalar_lea.hbm %s2, %s361
          %s363 = sshll.u32 %s353, 4
          %s364 = int_to_ptr.vmem [resolvable:$true] %s363
          %369 = dma.vmem_to_hbm [thread:$0]  %s364, 1024, %s362, %s350, 128, 128, 8
        $region40: #{tpu_custom_call.1} parent=27 // pred_fallthru
          _
      $region28: #{tpu_custom_call.1} parent=5 // pred_fallthru
        _
      %p370 = scmp.le.s32.totalorder 2, %s15
      // Predicated region
      $region41: #{tpu_custom_call.1} parent=5 // pred_check
        %p371 = pneg %p370
      $region42: #{tpu_custom_call.1} parent=5 // pred_check_branch
        %373 = sbr.rel (%p371) target = $region44
      $region43: #{tpu_custom_call.1} parent=5 // pred_region
        %s374 = ssub.s32 %s15, 2
        // Predicated region
        $region45: #{tpu_custom_call.1} parent=43 // pred_check
          %p375 = pneg %p91
        $region46: #{tpu_custom_call.1} parent=43 // pred_check_branch
          %377 = sbr.rel (%p375) target = $region48
        $region47: #{tpu_custom_call.1} parent=43 // pred_region
          %s378 = sand.u32 %s76, 1
          %s379 = scalar_lea.sflag [#allocation4], %s378
          %s380 = sand.u32 %s76, 1
          %s381 = smul.addr %s380, 64
          %s382 = scalar_lea.vmem [#allocation7], %s381
          %383 = dma.done %s379, 1024
        $region48: #{tpu_custom_call.1} parent=43 // pred_fallthru
          _
      $region44: #{tpu_custom_call.1} parent=5 // pred_fallthru
        _
    $region6: #{tpu_custom_call.1} parent=1 // loop_footer
      %s19 = sadd.s32 1, %s15
    $region7: #{tpu_custom_call.1} parent=1 // loop_footer_branch
      %14 = sbr.rel target = $region3
    $region8: #{tpu_custom_call.1} parent=1 // loop_exit
      _
    %384 = vsyncpa [#allocation3], 1
    %s385 = scalar_lea.sflag [#allocation3], 1
    %386 = vsyncpa %s385, 1
    %387 = vsyncpa [#allocation6], 1
    %388 = vsyncpa [#allocation4], 1
    %s389 = scalar_lea.sflag [#allocation4], 1
    %390 = vsyncpa %s389, 1

</llo_original>
